<compile_context>
chip_gen: v7x
topology: tpu7x:2x2x1
jax: 0.10.0
libtpu: 0.0.40
codegen_flags: <defaults>
</compile_context>

<pallas_src>
import jax
import jax.numpy as jnp
from jax.experimental import pallas as pl
from jax.experimental.pallas import tpu as pltpu


def _leaky_relu(x, slope=0.01):
    # F.leaky_relu default negative_slope = 0.01
    return jnp.where(x >= 0, x, slope * x)


def critic_kernel(layers_ref, wenc_ref, w1_ref, b1_ref, w2_ref, b2_ref,
                  w3_ref, b3_ref, out_ref):
    """One grid step == one batch tile of TB samples.

    layers_ref: (TB, L)     int32 layer indices in [0, L)
    wenc_ref  : (L*L, L*H)  block-diag biased encoder table kron(I_L, W_enc^T + b_enc)
    w1_ref    : (L*H, H)    linear_1 weight, transposed (matches row-major flatten)
    w2_ref    : (H, H)      linear_2 weight, transposed
    w3_ref    : (1, H)      linear_3 weight as a row (VPU mul + lane reduce)
    b3_ref    : (1, 1)      linear_3 bias
    out_ref   : (TB, 1)
    """
    idx = layers_ref[...]                                   # (TB, L) int32
    tb, L = idx.shape
    LL, _ = wenc_ref.shape                                  # L*L

    # one_hot(layers) laid out along a single lane axis of width L*L:
    #   oh[b, l*L + c] = (layers[b, l] == c)
    # Built with L static broadcast-compares: no gather / reshape needed.
    col = jax.lax.broadcasted_iota(jnp.int32, (tb, LL), 1)
    oh = (col == idx[:, 0:1]).astype(jnp.float32)
    for l in range(1, L):                                   # static, fully unrolled
        oh = oh + (col == (idx[:, l:l + 1] + l * L)).astype(jnp.float32)

    # encoder (bias already folded into the table) + sigmoid.
    # oh @ kron(I, W_enc^T + b_enc) == gathered rows, already flattened (TB, L*H).
    x = jnp.dot(oh, wenc_ref[...], preferred_element_type=jnp.float32)
    # exp(-x) may overflow to +inf for very negative x; 1/inf == 0 is the
    # correct sigmoid limit in f32 (no NaN).
    h1 = pl.reciprocal(1.0 + jnp.exp(-x), approx=False)     # (TB, L*H)

    # linear_1 + leaky_relu : single K = L*H matmul
    h2 = _leaky_relu(
        jnp.dot(h1, w1_ref[...], preferred_element_type=jnp.float32)
        + b1_ref[...])                                      # (TB, H)

    # linear_2 + leaky_relu
    h3 = _leaky_relu(
        jnp.dot(h2, w2_ref[...], preferred_element_type=jnp.float32)
        + b2_ref[...])                                      # (TB, H)

    # linear_3 + tanh : N=1 output column -> VPU multiply + XLU lane reduce
    r = jnp.sum(h3 * w3_ref[...], axis=-1, keepdims=True) + b3_ref[...]
    out_ref[...] = jnp.tanh(r)                              # (TB, 1)


def _round_up(x, m):
    return -(-x // m) * m


def _pick_batch_tile(B):
    """Choose (TB, B_pad): big tiles (amortize ~0.35us/step), but >= 2 grid
    steps for sizeable batches so ("parallel",) can shard across v7x's 2 TCs."""
    b8 = _round_up(max(B, 1), 8)
    if b8 < 32:
        tb = b8                                             # tiny batch: one step
    else:
        tb = min(_round_up(pl.cdiv(b8, 2), 8), 512)
    return tb, _round_up(b8, tb)


def critic_forward(layers, params, *, layer_limit, n_hidden):
    """layers: (B, L) int32 action indices in [0, layer_limit). Returns (B, 1) f32."""
    B = layers.shape[0]
    L, H = layer_limit, n_hidden
    K = L * H

    # --- one-time parameter prep (layout only; no per-call activation work) ---
    we_tb = params["W_enc"].T.astype(jnp.float32) + params["b_enc"][None, :]  # (L, H), bias folded
    wenc_big = jnp.kron(jnp.eye(L, dtype=jnp.float32), we_tb)                 # (L*L, K) block-diag
    w1_t = params["W1"].T                                   # (K, H): matches torch row-major flatten
    b1 = params["b1"].reshape(1, H)
    w2_t = params["W2"].T                                   # (H, H)
    b2 = params["b2"].reshape(1, H)
    w3_row = params["W3"].reshape(1, H)                     # final layer as a row (no N=1 MXU dot)
    b3 = params["b3"].reshape(1, 1)

    TB, B_pad = _pick_batch_tile(B)
    idx = layers.astype(jnp.int32)
    if B_pad != B:
        idx = jnp.pad(idx, ((0, B_pad - B), (0, 0)))        # padded rows sliced off below

    out = pl.pallas_call(
        critic_kernel,
        out_shape=jax.ShapeDtypeStruct((B_pad, 1), jnp.float32),
        grid=(B_pad // TB,),
        in_specs=[
            pl.BlockSpec((TB, L), lambda i: (i, 0)),        # int32 indices: 4*L bytes/sample
            pl.BlockSpec((L * L, K), lambda i: (0, 0)),     # biased block-diag encoder table
            pl.BlockSpec((K, H), lambda i: (0, 0)),         # linear_1 W^T
            pl.BlockSpec((1, H), lambda i: (0, 0)),         # linear_1 b
            pl.BlockSpec((H, H), lambda i: (0, 0)),         # linear_2 W^T
            pl.BlockSpec((1, H), lambda i: (0, 0)),         # linear_2 b
            pl.BlockSpec((1, H), lambda i: (0, 0)),         # linear_3 W (row)
            pl.BlockSpec((1, 1), lambda i: (0, 0)),         # linear_3 b
        ],
        # per-step output block -> pipelined writeback; output bytes are tiny
        # so the masked (TB,1) partial store is accepted knowingly.
        out_specs=pl.BlockSpec((TB, 1), lambda i: (i, 0)),
        compiler_params=pltpu.CompilerParams(
            dimension_semantics=("parallel",)),
    )(idx, wenc_big, w1_t, b1, w2_t, b2, w3_row, b3)
    return out[:B]


def critic_reference(layers, params, *, layer_limit, n_hidden):
    """Pure-JAX reference for correctness check (mirrors the PyTorch forward)."""
    L, H = layer_limit, n_hidden
    B = layers.shape[0]
    oh = jax.nn.one_hot(layers, L, dtype=jnp.float32)                     # (B, L, L)
    pre = jnp.einsum("blc,hc->blh", oh, params["W_enc"]) + params["b_enc"]
    h1 = 1.0 / (1.0 + jnp.exp(-pre))
    h1f = h1.reshape(B, L * H)
    h2 = _leaky_relu(h1f @ params["W1"].T + params["b1"])
    h3 = _leaky_relu(h2 @ params["W2"].T + params["b2"])
    return jnp.tanh(h3 @ params["W3"].T + params["b3"])                   # (B, 1)


if __name__ == "__main__":
    key = jax.random.PRNGKey(0)
    L, H = 8, 32                # layer_limit=8, n_hidden=32
    ks = jax.random.split(key, 10)

    # Deterministic synthetic parameters (shapes follow nn.Linear in __init__).
    params = {
        "W_enc": 0.1 * jax.random.normal(ks[0], (H, L), jnp.float32),
        "b_enc": 0.1 * jax.random.normal(ks[1], (H,), jnp.float32),
        "W1":    0.1 * jax.random.normal(ks[2], (H, L * H), jnp.float32),
        "b1":    0.1 * jax.random.normal(ks[3], (H,), jnp.float32),
        "W2":    0.1 * jax.random.normal(ks[4], (H, H), jnp.float32),
        "b2":    0.1 * jax.random.normal(ks[5], (H,), jnp.float32),
        "W3":    0.1 * jax.random.normal(ks[6], (1, H), jnp.float32),
        "b3":    0.1 * jax.random.normal(ks[7], (1,), jnp.float32),
    }

    # Small batch (single tile) -- matches the original module's usage.
    B = 4
    layers = jax.random.randint(ks[8], (B, L), 0, L, dtype=jnp.int32)
    rewards = critic_forward(layers, params, layer_limit=L, n_hidden=H)
    jax.block_until_ready(rewards)
    ref = critic_reference(layers, params, layer_limit=L, n_hidden=H)
    assert rewards.shape == (B, 1)
    assert bool(jnp.all(jnp.isfinite(rewards)))
    # Exact-f32 kernel path: tight tolerance locks in the flatten/transpose layout.
    assert bool(jnp.allclose(rewards, ref, atol=1e-4, rtol=1e-4))

    # Larger batch: exercises padding and the >=2-tile ("parallel") grid path.
    B2 = 40
    layers2 = jax.random.randint(ks[9], (B2, L), 0, L, dtype=jnp.int32)
    rewards2 = critic_forward(layers2, params, layer_limit=L, n_hidden=H)
    jax.block_until_ready(rewards2)
    ref2 = critic_reference(layers2, params, layer_limit=L, n_hidden=H)
    assert rewards2.shape == (B2, 1)
    assert bool(jnp.allclose(rewards2, ref2, atol=1e-4, rtol=1e-4))

    # TODO(synk): training pieces (MSE loss, Adam optimizer) are not part of the
    # forward pass and are intentionally not implemented as kernels.
    print("KERNEL_OK")
</pallas_src>

<mosaic_0001>
module attributes {stable_mosaic.version = 11 : i64} {
  func.func @critic_kernel(%arg0: i32, %arg1: memref<8x8xi32, #tpu.memory_space<vmem>>, %arg2: memref<64x256xf32, #tpu.memory_space<vmem>>, %arg3: memref<256x32xf32, #tpu.memory_space<vmem>>, %arg4: memref<1x32xf32, #tpu.memory_space<vmem>>, %arg5: memref<32x32xf32, #tpu.memory_space<vmem>>, %arg6: memref<1x32xf32, #tpu.memory_space<vmem>>, %arg7: memref<1x32xf32, #tpu.memory_space<vmem>>, %arg8: memref<1x1xf32, #tpu.memory_space<vmem>>, %arg9: memref<8x1xf32, #tpu.memory_space<vmem>>) attributes {dimension_semantics = [#tpu.dimension_semantics<parallel>], iteration_bounds = array<i64: 1>, scalar_prefetch = 0 : i64, scratch_operands = 0 : i64, tpu.core_type = #tpu.core_type<tc>, window_params = [{transform_indices = @transform_0, window_bounds = array<i64: 8, 8>}, {pipeline_mode = #tpu.pipeline_mode<synchronous>, transform_indices = @transform_1, window_bounds = array<i64: 64, 256>}, {pipeline_mode = #tpu.pipeline_mode<synchronous>, transform_indices = @transform_2, window_bounds = array<i64: 256, 32>}, {pipeline_mode = #tpu.pipeline_mode<synchronous>, transform_indices = @transform_3, window_bounds = array<i64: 1, 32>}, {pipeline_mode = #tpu.pipeline_mode<synchronous>, transform_indices = @transform_4, window_bounds = array<i64: 32, 32>}, {pipeline_mode = #tpu.pipeline_mode<synchronous>, transform_indices = @transform_5, window_bounds = array<i64: 1, 32>}, {pipeline_mode = #tpu.pipeline_mode<synchronous>, transform_indices = @transform_6, window_bounds = array<i64: 1, 32>}, {pipeline_mode = #tpu.pipeline_mode<synchronous>, transform_indices = @transform_7, window_bounds = array<i64: 1, 1>}, {transform_indices = @transform_8, window_bounds = array<i64: 8, 1>}]} {
    %c0 = arith.constant 0 : index
    %c0_0 = arith.constant 0 : index
    %0 = vector.load %arg1[%c0, %c0_0] : memref<8x8xi32, #tpu.memory_space<vmem>>, vector<8x8xi32>
    %1 = tpu.iota {dimensions = array<i32: 1>} : vector<8x64xi32>
    %2 = vector.extract_strided_slice %0 {offsets = [0, 0], sizes = [8, 1], strides = [1, 1]} : vector<8x8xi32> to vector<8x1xi32>
    %3 = vector.broadcast %2 : vector<8x1xi32> to vector<8x64xi32>
    %4 = arith.cmpi eq, %1, %3 : vector<8x64xi32>
    %5 = arith.extui %4 : vector<8x64xi1> to vector<8x64xi32>
    %6 = arith.sitofp %5 : vector<8x64xi32> to vector<8x64xf32>
    %7 = vector.extract_strided_slice %0 {offsets = [0, 1], sizes = [8, 1], strides = [1, 1]} : vector<8x8xi32> to vector<8x1xi32>
    %c8_i32 = arith.constant 8 : i32
    %8 = vector.broadcast %c8_i32 : i32 to vector<8x1xi32>
    %9 = arith.addi %7, %8 : vector<8x1xi32>
    %10 = vector.broadcast %9 : vector<8x1xi32> to vector<8x64xi32>
    %11 = arith.cmpi eq, %1, %10 : vector<8x64xi32>
    %12 = arith.extui %11 : vector<8x64xi1> to vector<8x64xi32>
    %13 = arith.sitofp %12 : vector<8x64xi32> to vector<8x64xf32>
    %14 = arith.addf %6, %13 : vector<8x64xf32>
    %15 = vector.extract_strided_slice %0 {offsets = [0, 2], sizes = [8, 1], strides = [1, 1]} : vector<8x8xi32> to vector<8x1xi32>
    %c16_i32 = arith.constant 16 : i32
    %16 = vector.broadcast %c16_i32 : i32 to vector<8x1xi32>
    %17 = arith.addi %15, %16 : vector<8x1xi32>
    %18 = vector.broadcast %17 : vector<8x1xi32> to vector<8x64xi32>
    %19 = arith.cmpi eq, %1, %18 : vector<8x64xi32>
    %20 = arith.extui %19 : vector<8x64xi1> to vector<8x64xi32>
    %21 = arith.sitofp %20 : vector<8x64xi32> to vector<8x64xf32>
    %22 = arith.addf %14, %21 : vector<8x64xf32>
    %23 = vector.extract_strided_slice %0 {offsets = [0, 3], sizes = [8, 1], strides = [1, 1]} : vector<8x8xi32> to vector<8x1xi32>
    %c24_i32 = arith.constant 24 : i32
    %24 = vector.broadcast %c24_i32 : i32 to vector<8x1xi32>
    %25 = arith.addi %23, %24 : vector<8x1xi32>
    %26 = vector.broadcast %25 : vector<8x1xi32> to vector<8x64xi32>
    %27 = arith.cmpi eq, %1, %26 : vector<8x64xi32>
    %28 = arith.extui %27 : vector<8x64xi1> to vector<8x64xi32>
    %29 = arith.sitofp %28 : vector<8x64xi32> to vector<8x64xf32>
    %30 = arith.addf %22, %29 : vector<8x64xf32>
    %31 = vector.extract_strided_slice %0 {offsets = [0, 4], sizes = [8, 1], strides = [1, 1]} : vector<8x8xi32> to vector<8x1xi32>
    %c32_i32 = arith.constant 32 : i32
    %32 = vector.broadcast %c32_i32 : i32 to vector<8x1xi32>
    %33 = arith.addi %31, %32 : vector<8x1xi32>
    %34 = vector.broadcast %33 : vector<8x1xi32> to vector<8x64xi32>
    %35 = arith.cmpi eq, %1, %34 : vector<8x64xi32>
    %36 = arith.extui %35 : vector<8x64xi1> to vector<8x64xi32>
    %37 = arith.sitofp %36 : vector<8x64xi32> to vector<8x64xf32>
    %38 = arith.addf %30, %37 : vector<8x64xf32>
    %39 = vector.extract_strided_slice %0 {offsets = [0, 5], sizes = [8, 1], strides = [1, 1]} : vector<8x8xi32> to vector<8x1xi32>
    %c40_i32 = arith.constant 40 : i32
    %40 = vector.broadcast %c40_i32 : i32 to vector<8x1xi32>
    %41 = arith.addi %39, %40 : vector<8x1xi32>
    %42 = vector.broadcast %41 : vector<8x1xi32> to vector<8x64xi32>
    %43 = arith.cmpi eq, %1, %42 : vector<8x64xi32>
    %44 = arith.extui %43 : vector<8x64xi1> to vector<8x64xi32>
    %45 = arith.sitofp %44 : vector<8x64xi32> to vector<8x64xf32>
    %46 = arith.addf %38, %45 : vector<8x64xf32>
    %47 = vector.extract_strided_slice %0 {offsets = [0, 6], sizes = [8, 1], strides = [1, 1]} : vector<8x8xi32> to vector<8x1xi32>
    %c48_i32 = arith.constant 48 : i32
    %48 = vector.broadcast %c48_i32 : i32 to vector<8x1xi32>
    %49 = arith.addi %47, %48 : vector<8x1xi32>
    %50 = vector.broadcast %49 : vector<8x1xi32> to vector<8x64xi32>
    %51 = arith.cmpi eq, %1, %50 : vector<8x64xi32>
    %52 = arith.extui %51 : vector<8x64xi1> to vector<8x64xi32>
    %53 = arith.sitofp %52 : vector<8x64xi32> to vector<8x64xf32>
    %54 = arith.addf %46, %53 : vector<8x64xf32>
    %55 = vector.extract_strided_slice %0 {offsets = [0, 7], sizes = [8, 1], strides = [1, 1]} : vector<8x8xi32> to vector<8x1xi32>
    %c56_i32 = arith.constant 56 : i32
    %56 = vector.broadcast %c56_i32 : i32 to vector<8x1xi32>
    %57 = arith.addi %55, %56 : vector<8x1xi32>
    %58 = vector.broadcast %57 : vector<8x1xi32> to vector<8x64xi32>
    %59 = arith.cmpi eq, %1, %58 : vector<8x64xi32>
    %60 = arith.extui %59 : vector<8x64xi1> to vector<8x64xi32>
    %61 = arith.sitofp %60 : vector<8x64xi32> to vector<8x64xf32>
    %62 = arith.addf %54, %61 : vector<8x64xf32>
    %c0_1 = arith.constant 0 : index
    %c0_2 = arith.constant 0 : index
    %63 = vector.load %arg2[%c0_1, %c0_2] : memref<64x256xf32, #tpu.memory_space<vmem>>, vector<64x256xf32>
    %cst = arith.constant dense<0.000000e+00> : vector<8x256xf32>
    %64 = tpu.matmul %62, %63, %cst {dimension_numbers = #tpu.dot_dimension_numbers<[1], [0], [0], [1], [0, 0, 1, 1], [], []>} : vector<8x64xf32>, vector<64x256xf32>, vector<8x256xf32> -> vector<8x256xf32>
    %cst_3 = arith.constant 0.000000e+00 : f32
    %65 = vector.broadcast %cst_3 : f32 to vector<8x256xf32>
    %66 = arith.subf %65, %64 : vector<8x256xf32>
    %67 = math.exp %66 : vector<8x256xf32>
    %cst_4 = arith.constant 1.000000e+00 : f32
    %68 = vector.broadcast %cst_4 : f32 to vector<8x256xf32>
    %69 = arith.addf %68, %67 : vector<8x256xf32>
    %70 = tpu.reciprocal %69 : vector<8x256xf32> -> vector<8x256xf32>
    %c0_5 = arith.constant 0 : index
    %c0_6 = arith.constant 0 : index
    %71 = vector.load %arg3[%c0_5, %c0_6] : memref<256x32xf32, #tpu.memory_space<vmem>>, vector<256x32xf32>
    %cst_7 = arith.constant dense<0.000000e+00> : vector<8x32xf32>
    %72 = tpu.matmul %70, %71, %cst_7 {dimension_numbers = #tpu.dot_dimension_numbers<[1], [0], [0], [1], [0, 0, 1, 1], [], []>} : vector<8x256xf32>, vector<256x32xf32>, vector<8x32xf32> -> vector<8x32xf32>
    %c0_8 = arith.constant 0 : index
    %c0_9 = arith.constant 0 : index
    %73 = vector.load %arg4[%c0_8, %c0_9] : memref<1x32xf32, #tpu.memory_space<vmem>>, vector<1x32xf32>
    %74 = vector.broadcast %73 : vector<1x32xf32> to vector<8x32xf32>
    %75 = arith.addf %72, %74 : vector<8x32xf32>
    %cst_10 = arith.constant 0.000000e+00 : f32
    %76 = vector.broadcast %cst_10 : f32 to vector<8x32xf32>
    %77 = arith.cmpf oge, %75, %76 : vector<8x32xf32>
    %cst_11 = arith.constant 0.00999999977 : f32
    %78 = vector.broadcast %cst_11 : f32 to vector<8x32xf32>
    %79 = arith.mulf %78, %75 : vector<8x32xf32>
    %80 = arith.select %77, %75, %79 : vector<8x32xi1>, vector<8x32xf32>
    %c0_12 = arith.constant 0 : index
    %c0_13 = arith.constant 0 : index
    %81 = vector.load %arg5[%c0_12, %c0_13] : memref<32x32xf32, #tpu.memory_space<vmem>>, vector<32x32xf32>
    %cst_14 = arith.constant dense<0.000000e+00> : vector<8x32xf32>
    %82 = tpu.matmul %80, %81, %cst_14 {dimension_numbers = #tpu.dot_dimension_numbers<[1], [0], [0], [1], [0, 0, 1, 1], [], []>} : vector<8x32xf32>, vector<32x32xf32>, vector<8x32xf32> -> vector<8x32xf32>
    %c0_15 = arith.constant 0 : index
    %c0_16 = arith.constant 0 : index
    %83 = vector.load %arg6[%c0_15, %c0_16] : memref<1x32xf32, #tpu.memory_space<vmem>>, vector<1x32xf32>
    %84 = vector.broadcast %83 : vector<1x32xf32> to vector<8x32xf32>
    %85 = arith.addf %82, %84 : vector<8x32xf32>
    %cst_17 = arith.constant 0.000000e+00 : f32
    %86 = vector.broadcast %cst_17 : f32 to vector<8x32xf32>
    %87 = arith.cmpf oge, %85, %86 : vector<8x32xf32>
    %cst_18 = arith.constant 0.00999999977 : f32
    %88 = vector.broadcast %cst_18 : f32 to vector<8x32xf32>
    %89 = arith.mulf %88, %85 : vector<8x32xf32>
    %90 = arith.select %87, %85, %89 : vector<8x32xi1>, vector<8x32xf32>
    %c0_19 = arith.constant 0 : index
    %c0_20 = arith.constant 0 : index
    %91 = vector.load %arg7[%c0_19, %c0_20] : memref<1x32xf32, #tpu.memory_space<vmem>>, vector<1x32xf32>
    %92 = vector.broadcast %91 : vector<1x32xf32> to vector<8x32xf32>
    %93 = arith.mulf %90, %92 : vector<8x32xf32>
    %cst_21 = arith.constant dense<0.000000e+00> : vector<8xf32>
    %94 = vector.multi_reduction <add>, %93, %cst_21 [1] : vector<8x32xf32> to vector<8xf32>
    %95 = vector.shape_cast %94 : vector<8xf32> to vector<8x1xf32>
    %c0_22 = arith.constant 0 : index
    %c0_23 = arith.constant 0 : index
    %96 = vector.load %arg8[%c0_22, %c0_23] : memref<1x1xf32, #tpu.memory_space<vmem>>, vector<1x1xf32>
    %97 = vector.broadcast %96 : vector<1x1xf32> to vector<8x1xf32>
    %98 = arith.addf %95, %97 : vector<8x1xf32>
    %99 = math.tanh %98 : vector<8x1xf32>
    %c0_24 = arith.constant 0 : index
    %c0_25 = arith.constant 0 : index
    %100 = vector.load %arg9[%c0_24, %c0_25] : memref<8x1xf32, #tpu.memory_space<vmem>>, vector<8x1xf32>
    tpu.vector_store %arg9[%c0_24, %c0_25], %99 {strides = array<i32>} : memref<8x1xf32, #tpu.memory_space<vmem>>, vector<8x1xf32>,
    return
  }
  func.func @transform_0(%arg0: i32) -> (i32, i32) {
    %c0_i32 = arith.constant 0 : i32
    %c0_i32_0 = arith.constant 0 : i32
    return %arg0, %c0_i32 : i32, i32
  }
  func.func @transform_1(%arg0: i32) -> (i32, i32) {
    %c0_i32 = arith.constant 0 : i32
    %c0_i32_0 = arith.constant 0 : i32
    %c0_i32_1 = arith.constant 0 : i32
    return %c0_i32, %c0_i32_0 : i32, i32
  }
  func.func @transform_2(%arg0: i32) -> (i32, i32) {
    %c0_i32 = arith.constant 0 : i32
    %c0_i32_0 = arith.constant 0 : i32
    %c0_i32_1 = arith.constant 0 : i32
    return %c0_i32, %c0_i32_0 : i32, i32
  }
  func.func @transform_3(%arg0: i32) -> (i32, i32) {
    %c0_i32 = arith.constant 0 : i32
    %c0_i32_0 = arith.constant 0 : i32
    %c0_i32_1 = arith.constant 0 : i32
    return %c0_i32, %c0_i32_0 : i32, i32
  }
  func.func @transform_4(%arg0: i32) -> (i32, i32) {
    %c0_i32 = arith.constant 0 : i32
    %c0_i32_0 = arith.constant 0 : i32
    %c0_i32_1 = arith.constant 0 : i32
    return %c0_i32, %c0_i32_0 : i32, i32
  }
  func.func @transform_5(%arg0: i32) -> (i32, i32) {
    %c0_i32 = arith.constant 0 : i32
    %c0_i32_0 = arith.constant 0 : i32
    %c0_i32_1 = arith.constant 0 : i32
    return %c0_i32, %c0_i32_0 : i32, i32
  }
  func.func @transform_6(%arg0: i32) -> (i32, i32) {
    %c0_i32 = arith.constant 0 : i32
    %c0_i32_0 = arith.constant 0 : i32
    %c0_i32_1 = arith.constant 0 : i32
    return %c0_i32, %c0_i32_0 : i32, i32
  }
  func.func @transform_7(%arg0: i32) -> (i32, i32) {
    %c0_i32 = arith.constant 0 : i32
    %c0_i32_0 = arith.constant 0 : i32
    %c0_i32_1 = arith.constant 0 : i32
    return %c0_i32, %c0_i32_0 : i32, i32
  }
  func.func @transform_8(%arg0: i32) -> (i32, i32) {
    %c0_i32 = arith.constant 0 : i32
    %c0_i32_0 = arith.constant 0 : i32
    return %arg0, %c0_i32 : i32, i32
  }
}

</mosaic_0001>

<llo_original>
// kernel: tpu_custom_call.1
$region0: #{tpu_custom_call.1}
  #allocation0 [shape = 'u32[]', space=smem, size = 0x4, offset = 0x4, fixed_abs, tag = 'smem constant byte address 0x4 - core index']
  #allocation1 [shape = 'u32[144,128]{1,0:T(1,128)}', space=vmem, size = 0x12000, scoped, tag = 'internal scratch']
  #allocation2 [shape = 'f32[1,1]{1,0:T(1,128)S(1)}', space=vmem, size = 0x200, scoped, tag = 'scoped memory for tpu_custom_call.1']
  %s0 = inlined_call_operand.vmem [shape: s32[8,8], index: 0, kind: input, shape index: {}]
  %s1 = inlined_call_operand.vmem [shape: f32[64,256], index: 1, kind: input, shape index: {}]
  %s2 = inlined_call_operand.vmem [shape: f32[256,32], index: 2, kind: input, shape index: {}]
  %s3 = inlined_call_operand.vmem [shape: f32[1,32], index: 3, kind: input, shape index: {}]
  %s4 = inlined_call_operand.vmem [shape: f32[32,32], index: 4, kind: input, shape index: {}]
  %s5 = inlined_call_operand.vmem [shape: f32[1,32], index: 5, kind: input, shape index: {}]
  %s6 = inlined_call_operand.vmem [shape: f32[1,32], index: 6, kind: input, shape index: {}]
  %s7 = inlined_call_operand.<no memory space> [shape: f32[1,1], index: 7, kind: input, shape index: {}]
  %s8 = inlined_call_operand.vmem [shape: f32[8,1], index: 8, kind: output, shape index: {}]
  %s9 = sld [smem:[#allocation0]]
  $region42: #{tpu_custom_call.1} parent=0
    _
  %s11 = ssub.s32 1, %s9
  %s12 = scalar_select 0, %s11, %s9
  %v13 = vstv %s7
  %14 = vst [vmem:[#allocation2] sm:$0x1] %v13
  // Predicated region
  $region2: #{tpu_custom_call.1} parent=0 // pred_check
    _
  $region3: #{tpu_custom_call.1} parent=0 // pred_check_branch
    %16 = sbr.rel (0) target = $region5
  $region4: #{tpu_custom_call.1} parent=0 // pred_region
    _
  $region5: #{tpu_custom_call.1} parent=0 // pred_fallthru
    _
  // Predicated region
  $region6: #{tpu_custom_call.1} parent=0 // pred_check
    _
  $region7: #{tpu_custom_call.1} parent=0 // pred_check_branch
    %18 = sbr.rel (0) target = $region9
  $region8: #{tpu_custom_call.1} parent=0 // pred_region
    _
  $region9: #{tpu_custom_call.1} parent=0 // pred_fallthru
    _
  // Predicated region
  $region10: #{tpu_custom_call.1} parent=0 // pred_check
    _
  $region11: #{tpu_custom_call.1} parent=0 // pred_check_branch
    %20 = sbr.rel (0) target = $region13
  $region12: #{tpu_custom_call.1} parent=0 // pred_region
    _
  $region13: #{tpu_custom_call.1} parent=0 // pred_fallthru
    _
  // Predicated region
  $region14: #{tpu_custom_call.1} parent=0 // pred_check
    _
  $region15: #{tpu_custom_call.1} parent=0 // pred_check_branch
    %22 = sbr.rel (0) target = $region17
  $region16: #{tpu_custom_call.1} parent=0 // pred_region
    _
  $region17: #{tpu_custom_call.1} parent=0 // pred_fallthru
    _
  // Predicated region
  $region18: #{tpu_custom_call.1} parent=0 // pred_check
    _
  $region19: #{tpu_custom_call.1} parent=0 // pred_check_branch
    %24 = sbr.rel (0) target = $region21
  $region20: #{tpu_custom_call.1} parent=0 // pred_region
    _
  $region21: #{tpu_custom_call.1} parent=0 // pred_fallthru
    _
  // Predicated region
  $region22: #{tpu_custom_call.1} parent=0 // pred_check
    _
  $region23: #{tpu_custom_call.1} parent=0 // pred_check_branch
    %26 = sbr.rel (0) target = $region25
  $region24: #{tpu_custom_call.1} parent=0 // pred_region
    _
  $region25: #{tpu_custom_call.1} parent=0 // pred_fallthru
    _
  // Predicated region
  $region26: #{tpu_custom_call.1} parent=0 // pred_check
    _
  $region27: #{tpu_custom_call.1} parent=0 // pred_check_branch
    %28 = sbr.rel (0) target = $region29
  $region28: #{tpu_custom_call.1} parent=0 // pred_region
    _
  $region29: #{tpu_custom_call.1} parent=0 // pred_fallthru
    _
  // Predicated region
  $region30: #{tpu_custom_call.1} parent=0 // pred_check
    _
  $region31: #{tpu_custom_call.1} parent=0 // pred_check_branch
    %30 = sbr.rel (0) target = $region33
  $region32: #{tpu_custom_call.1} parent=0 // pred_region
    _
  $region33: #{tpu_custom_call.1} parent=0 // pred_fallthru
    _
  %v31 = vld [vmem:[%s0] sm:$0xff]
  %v32 = vlaneseq
  %v33 = vand.u32 %v32, 127
  %34 = vset.pattern.permute.xlu0 0
  %35 = vperm.xlu0 %34, %v31
  %v36 = vpop.permute.xlu0 %35
  %vm37 = vcmp.eq.s32.totalorder %v33, %v36
  %v38 = vsel %vm37, 1, 0
  %v39 = vcvt.s32.f32 %v38
  %v40 = vadd.s32 %v31, 8
  %41 = vset.pattern.permute.xlu0 1
  %42 = vperm.xlu0 %41, %v40
  %v43 = vpop.permute.xlu0 %42
  %vm44 = vcmp.eq.s32.totalorder %v33, %v43
  %v45 = vsel %vm44, 1, 0
  %v46 = vcvt.s32.f32 %v45
  %v47 = vadd.f32 %v39, %v46
  %v48 = vadd.s32 %v31, 16
  %49 = vset.pattern.permute.xlu0 2
  %50 = vperm.xlu0 %49, %v48
  %v51 = vpop.permute.xlu0 %50
  %vm52 = vcmp.eq.s32.totalorder %v33, %v51
  %v53 = vsel %vm52, 1, 0
  %v54 = vcvt.s32.f32 %v53
  %v55 = vadd.f32 %v47, %v54
  %v56 = vadd.s32 %v31, 24
  %57 = vset.pattern.permute.xlu0 3
  %58 = vperm.xlu0 %57, %v56
  %v59 = vpop.permute.xlu0 %58
  %vm60 = vcmp.eq.s32.totalorder %v33, %v59
  %v61 = vsel %vm60, 1, 0
  %v62 = vcvt.s32.f32 %v61
  %v63 = vadd.f32 %v55, %v62
  %v64 = vadd.s32 %v31, 32
  %65 = vset.pattern.permute.xlu0 4
  %66 = vperm.xlu0 %65, %v64
  %v67 = vpop.permute.xlu0 %66
  %vm68 = vcmp.eq.s32.totalorder %v33, %v67
  %v69 = vsel %vm68, 1, 0
  %v70 = vcvt.s32.f32 %v69
  %v71 = vadd.f32 %v63, %v70
  %v72 = vadd.s32 %v31, 40
  %73 = vset.pattern.permute.xlu0 5
  %74 = vperm.xlu0 %73, %v72
  %v75 = vpop.permute.xlu0 %74
  %vm76 = vcmp.eq.s32.totalorder %v33, %v75
  %v77 = vsel %vm76, 1, 0
  %v78 = vcvt.s32.f32 %v77
  %v79 = vadd.f32 %v71, %v78
  %v80 = vadd.s32 %v31, 48
  %81 = vset.pattern.permute.xlu0 6
  %82 = vperm.xlu0 %81, %v80
  %v83 = vpop.permute.xlu0 %82
  %vm84 = vcmp.eq.s32.totalorder %v33, %v83
  %v85 = vsel %vm84, 1, 0
  %v86 = vcvt.s32.f32 %v85
  %v87 = vadd.f32 %v79, %v86
  %v88 = vadd.s32 %v31, 56
  %89 = vset.pattern.permute.xlu0 7
  %90 = vperm.xlu0 %89, %v88
  %v91 = vpop.permute.xlu0 %90
  %vm92 = vcmp.eq.s32.totalorder %v33, %v91
  %v93 = vsel %vm92, 1, 0
  %v94 = vcvt.s32.f32 %v93
  %v95 = vadd.f32 %v87, %v94
  %v96 = vld [vmem:[%s1] sm:$0xff]
  %v97 = vld [vmem:[%s1 + $0x8] sm:$0xff]
  %v98 = vld [vmem:[%s1 + $0x10] sm:$0xff]
  %v99 = vld [vmem:[%s1 + $0x18] sm:$0xff]
  %v100 = vld [vmem:[%s1 + $0x20] sm:$0xff]
  %v101 = vld [vmem:[%s1 + $0x28] sm:$0xff]
  %v102 = vld [vmem:[%s1 + $0x30] sm:$0xff]
  %v103 = vld [vmem:[%s1 + $0x38] sm:$0xff]
  %v104 = vld [vmem:[%s1 + $0x40] sm:$0xff]
  %v105 = vld [vmem:[%s1 + $0x48] sm:$0xff]
  %v106 = vld [vmem:[%s1 + $0x50] sm:$0xff]
  %v107 = vld [vmem:[%s1 + $0x58] sm:$0xff]
  %v108 = vld [vmem:[%s1 + $0x60] sm:$0xff]
  %v109 = vld [vmem:[%s1 + $0x68] sm:$0xff]
  %v110 = vld [vmem:[%s1 + $0x70] sm:$0xff]
  %v111 = vld [vmem:[%s1 + $0x78] sm:$0xff]
  %vm112 = vcmask 523264
  %v114 = vsel %vm112, %v95, 0
  %116 = vmatprep.subr.mxu0 %v97
  %117 = vmatpush1.msra.mxu0 %v96
  %118 = vmatprep.subr.mxu0 %v99
  %119 = vmatpush1.msra.mxu0 %v98
  %120 = vmatprep.subr.mxu0 %v101
  %121 = vmatpush1.msra.mxu0 %v100
  %122 = vmatprep.subr.mxu0 %v103
  %123 = vmatpush1.msra.mxu0 %v102
  %124 = vmatprep.subr.mxu0 %v105
  %125 = vmatpush1.msra.mxu0 %v104
  %126 = vmatprep.subr.mxu0 %v107
  %127 = vmatpush1.msra.mxu0 %v106
  %128 = vmatprep.subr.mxu0 %v109
  %129 = vmatpush1.msra.mxu0 %v108
  %130 = vmatprep.subr.mxu0 %v111
  %131 = vmatpush1.msra.mxu0 %v110
  %132 = vmatprep.subr.mxu0 0.0
  %133 = vmatpush1.msra.mxu0 0.0
  %134 = vmatprep.subr.mxu0 0.0
  %135 = vmatpush1.msra.mxu0 0.0
  %136 = vmatprep.subr.mxu0 0.0
  %137 = vmatpush1.msra.mxu0 0.0
  %138 = vmatprep.subr.mxu0 0.0
  %139 = vmatpush1.msra.mxu0 0.0
  %140 = vmatprep.subr.mxu0 0.0
  %141 = vmatpush1.msra.mxu0 0.0
  %142 = vmatprep.subr.mxu0 0.0
  %143 = vmatpush1.msra.mxu0 0.0
  %144 = vmatprep.subr.mxu0 0.0
  %145 = vmatpush1.msra.mxu0 0.0
  %146 = vmatprep.subr.mxu0 0.0
  %147 = vmatpush1.msra.mxu0 0.0
  %148 = vmatprep.subr.mxu0 0.0
  %149 = vmatpush1.msra.mxu0 0.0
  %150 = vmatprep.subr.mxu0 0.0
  %151 = vmatpush1.msra.mxu0 0.0
  %152 = vmatprep.subr.mxu0 0.0
  %153 = vmatpush1.msra.mxu0 0.0
  %154 = vmatprep.subr.mxu0 0.0
  %155 = vmatpush1.msra.mxu0 0.0
  %156 = vmatprep.subr.mxu0 0.0
  %157 = vmatpush1.msra.mxu0 0.0
  %158 = vmatprep.subr.mxu0 0.0
  %159 = vmatpush1.msra.mxu0 0.0
  %160 = vmatprep.subr.mxu0 0.0
  %161 = vmatpush1.msra.mxu0 0.0
  %162 = vmatprep.subr.mxu0 0.0
  %163 = vmatpush1.msra.mxu0 0.0
  %164 = vmatprep.subr.mxu0 0.0
  %165 = vmatpush1.msra.mxu0 0.0
  %166 = vmatprep.subr.mxu0 0.0
  %167 = vmatpush1.msra.mxu0 0.0
  %168 = vmatprep.subr.mxu0 0.0
  %169 = vmatpush1.msra.mxu0 0.0
  %170 = vmatprep.subr.mxu0 0.0
  %171 = vmatpush1.msra.mxu0 0.0
  %172 = vmatprep.subr.mxu0 0.0
  %173 = vmatpush1.msra.mxu0 0.0
  %174 = vmatprep.subr.mxu0 0.0
  %175 = vmatpush1.msra.mxu0 0.0
  %176 = vmatprep.subr.mxu0 0.0
  %177 = vmatpush1.msra.mxu0 0.0
  %178 = vmatprep.subr.mxu0 0.0
  %179 = vmatpush1.msra.mxu0 0.0
  %180 = vmatprep.mubr.f32.mxu0 0.0
  %181 = vmatmul.mubr.f32.gmra.mrb[0].mxu0 %v114
  %v182 = vpop.f32.mrb[0].mxu0
  %v183 = vadd.f32 0.0, %v182
  %v184 = vpop.f32.mrb[0].mxu0
  %v185 = vadd.f32 0.0, %v184
  %186 = vdwg.mxu0
  %v187 = vsub.f32 0.0, %v183
  %v188 = vsub.f32 0.0, %v185
  %v189 = vmul.f32 %v187, 1.442695
  %v190 = vpow.pop %v189
  %v191 = vmul.f32 %v188, 1.442695
  %v192 = vpow.pop %v191
  %v193 = vadd.f32 %v190, 1.0
  %v194 = vadd.f32 %v192, 1.0
  %v195 = vrcp.pop %v193
  %v196 = vrcp.pop %v194
  %v197 = vld [vmem:[%s2] sm:$0xff]
  %v198 = vld [vmem:[%s2 + $0x8] sm:$0xff]
  %v199 = vld [vmem:[%s2 + $0x10] sm:$0xff]
  %v200 = vld [vmem:[%s2 + $0x18] sm:$0xff]
  %v201 = vld [vmem:[%s2 + $0x20] sm:$0xff]
  %v202 = vld [vmem:[%s2 + $0x28] sm:$0xff]
  %v203 = vld [vmem:[%s2 + $0x30] sm:$0xff]
  %v204 = vld [vmem:[%s2 + $0x38] sm:$0xff]
  %v205 = vld [vmem:[%s2 + $0x40] sm:$0xff]
  %v206 = vld [vmem:[%s2 + $0x48] sm:$0xff]
  %v207 = vld [vmem:[%s2 + $0x50] sm:$0xff]
  %v208 = vld [vmem:[%s2 + $0x58] sm:$0xff]
  %v209 = vld [vmem:[%s2 + $0x60] sm:$0xff]
  %v210 = vld [vmem:[%s2 + $0x68] sm:$0xff]
  %v211 = vld [vmem:[%s2 + $0x70] sm:$0xff]
  %v212 = vld [vmem:[%s2 + $0x78] sm:$0xff]
  %v213 = vld [vmem:[%s2 + $0x80] sm:$0xff]
  %v214 = vld [vmem:[%s2 + $0x88] sm:$0xff]
  %v215 = vld [vmem:[%s2 + $0x90] sm:$0xff]
  %v216 = vld [vmem:[%s2 + $0x98] sm:$0xff]
  %v217 = vld [vmem:[%s2 + $0xa0] sm:$0xff]
  %v218 = vld [vmem:[%s2 + $0xa8] sm:$0xff]
  %v219 = vld [vmem:[%s2 + $0xb0] sm:$0xff]
  %v220 = vld [vmem:[%s2 + $0xb8] sm:$0xff]
  %v221 = vld [vmem:[%s2 + $0xc0] sm:$0xff]
  %v222 = vld [vmem:[%s2 + $0xc8] sm:$0xff]
  %v223 = vld [vmem:[%s2 + $0xd0] sm:$0xff]
  %v224 = vld [vmem:[%s2 + $0xd8] sm:$0xff]
  %v225 = vld [vmem:[%s2 + $0xe0] sm:$0xff]
  %v226 = vld [vmem:[%s2 + $0xe8] sm:$0xff]
  %v227 = vld [vmem:[%s2 + $0xf0] sm:$0xff]
  %v228 = vld [vmem:[%s2 + $0xf8] sm:$0xff]
  %v229 = vld [vmem:[%s3] sm:$0x1]
  %v231 = vlaneseq
  %v232 = vshrl.u32 %v231, 7
  %v233 = vsub.s32 0, %v232
  %v234 = vrot.slane %v229, %v233
  %236 = vmatprep.subr.mxu0 0.0
  %237 = vmatpush1.msra.mxu0 %v197
  %238 = vmatprep.subr.mxu0 0.0
  %239 = vmatpush1.msra.mxu0 %v198
  %240 = vmatprep.subr.mxu0 0.0
  %241 = vmatpush1.msra.mxu0 %v199
  %242 = vmatprep.subr.mxu0 0.0
  %243 = vmatpush1.msra.mxu0 %v200
  %244 = vmatprep.subr.mxu0 0.0
  %245 = vmatpush1.msra.mxu0 %v201
  %246 = vmatprep.subr.mxu0 0.0
  %247 = vmatpush1.msra.mxu0 %v202
  %248 = vmatprep.subr.mxu0 0.0
  %249 = vmatpush1.msra.mxu0 %v203
  %250 = vmatprep.subr.mxu0 0.0
  %251 = vmatpush1.msra.mxu0 %v204
  %252 = vmatprep.subr.mxu0 0.0
  %253 = vmatpush1.msra.mxu0 %v205
  %254 = vmatprep.subr.mxu0 0.0
  %255 = vmatpush1.msra.mxu0 %v206
  %256 = vmatprep.subr.mxu0 0.0
  %257 = vmatpush1.msra.mxu0 %v207
  %258 = vmatprep.subr.mxu0 0.0
  %259 = vmatpush1.msra.mxu0 %v208
  %260 = vmatprep.subr.mxu0 0.0
  %261 = vmatpush1.msra.mxu0 %v209
  %262 = vmatprep.subr.mxu0 0.0
  %263 = vmatpush1.msra.mxu0 %v210
  %264 = vmatprep.subr.mxu0 0.0
  %265 = vmatpush1.msra.mxu0 %v211
  %266 = vmatprep.subr.mxu0 0.0
  %267 = vmatpush1.msra.mxu0 %v212
  %268 = vmatprep.subr.mxu0 0.0
  %269 = vmatpush1.msra.mxu0 %v213
  %270 = vmatprep.subr.mxu0 0.0
  %271 = vmatpush1.msra.mxu0 %v214
  %272 = vmatprep.subr.mxu0 0.0
  %273 = vmatpush1.msra.mxu0 %v215
  %274 = vmatprep.subr.mxu0 0.0
  %275 = vmatpush1.msra.mxu0 %v216
  %276 = vmatprep.subr.mxu0 0.0
  %277 = vmatpush1.msra.mxu0 %v217
  %278 = vmatprep.subr.mxu0 0.0
  %279 = vmatpush1.msra.mxu0 %v218
  %280 = vmatprep.subr.mxu0 0.0
  %281 = vmatpush1.msra.mxu0 %v219
  %282 = vmatprep.subr.mxu0 0.0
  %283 = vmatpush1.msra.mxu0 %v220
  %284 = vmatprep.subr.mxu0 0.0
  %285 = vmatpush1.msra.mxu0 %v221
  %286 = vmatprep.subr.mxu0 0.0
  %287 = vmatpush1.msra.mxu0 %v222
  %288 = vmatprep.subr.mxu0 0.0
  %289 = vmatpush1.msra.mxu0 %v223
  %290 = vmatprep.subr.mxu0 0.0
  %291 = vmatpush1.msra.mxu0 %v224
  %292 = vmatprep.subr.mxu0 0.0
  %293 = vmatpush1.msra.mxu0 %v225
  %294 = vmatprep.subr.mxu0 0.0
  %295 = vmatpush1.msra.mxu0 %v226
  %296 = vmatprep.subr.mxu0 0.0
  %297 = vmatpush1.msra.mxu0 %v227
  %298 = vmatprep.subr.mxu0 0.0
  %299 = vmatpush1.msra.mxu0 %v228
  %300 = vmatprep.mubr.f32.mxu0 %v196
  %301 = vmatmul.mubr.f32.gmra.mrb[0].mxu0 %v195
  %v302 = vpop.f32.mrb[0].mxu0
  %v303 = vadd.f32 %v234, %v302
  %v304 = vpop.f32.mrb[0].mxu0
  %305 = vdwg.mxu0
  %vm306 = vcmp.ge.f32.partialorder %v303, 0.0
  %v307 = vmul.f32 %v303, 0.01
  %v308 = vsel %vm306, %v303, %v307
  %v309 = vld [vmem:[%s4] sm:$0xff]
  %v310 = vld [vmem:[%s4 + $0x8] sm:$0xff]
  %v311 = vld [vmem:[%s4 + $0x10] sm:$0xff]
  %v312 = vld [vmem:[%s4 + $0x18] sm:$0xff]
  %v313 = vld [vmem:[%s5] sm:$0x1]
  %v315 = vlaneseq
  %v316 = vshrl.u32 %v315, 7
  %v317 = vsub.s32 0, %v316
  %v318 = vrot.slane %v313, %v317
  %vm320 = vcmask 261120
  %v322 = vsel %vm320, %v308, 0
  %324 = vmatprep.subr.mxu0 0.0
  %325 = vmatpush1.msra.mxu0 %v309
  %326 = vmatprep.subr.mxu0 0.0
  %327 = vmatpush1.msra.mxu0 %v310
  %328 = vmatprep.subr.mxu0 0.0
  %329 = vmatpush1.msra.mxu0 %v311
  %330 = vmatprep.subr.mxu0 0.0
  %331 = vmatpush1.msra.mxu0 %v312
  %332 = vmatprep.subr.mxu0 0.0
  %333 = vmatpush1.msra.mxu0 0.0
  %334 = vmatprep.subr.mxu0 0.0
  %335 = vmatpush1.msra.mxu0 0.0
  %336 = vmatprep.subr.mxu0 0.0
  %337 = vmatpush1.msra.mxu0 0.0
  %338 = vmatprep.subr.mxu0 0.0
  %339 = vmatpush1.msra.mxu0 0.0
  %340 = vmatprep.subr.mxu0 0.0
  %341 = vmatpush1.msra.mxu0 0.0
  %342 = vmatprep.subr.mxu0 0.0
  %343 = vmatpush1.msra.mxu0 0.0
  %344 = vmatprep.subr.mxu0 0.0
  %345 = vmatpush1.msra.mxu0 0.0
  %346 = vmatprep.subr.mxu0 0.0
  %347 = vmatpush1.msra.mxu0 0.0
  %348 = vmatprep.subr.mxu0 0.0
  %349 = vmatpush1.msra.mxu0 0.0
  %350 = vmatprep.subr.mxu0 0.0
  %351 = vmatpush1.msra.mxu0 0.0
  %352 = vmatprep.subr.mxu0 0.0
  %353 = vmatpush1.msra.mxu0 0.0
  %354 = vmatprep.subr.mxu0 0.0
  %355 = vmatpush1.msra.mxu0 0.0
  %356 = vmatprep.subr.mxu0 0.0
  %357 = vmatpush1.msra.mxu0 0.0
  %358 = vmatprep.subr.mxu0 0.0
  %359 = vmatpush1.msra.mxu0 0.0
  %360 = vmatprep.subr.mxu0 0.0
  %361 = vmatpush1.msra.mxu0 0.0
  %362 = vmatprep.subr.mxu0 0.0
  %363 = vmatpush1.msra.mxu0 0.0
  %364 = vmatprep.subr.mxu0 0.0
  %365 = vmatpush1.msra.mxu0 0.0
  %366 = vmatprep.subr.mxu0 0.0
  %367 = vmatpush1.msra.mxu0 0.0
  %368 = vmatprep.subr.mxu0 0.0
  %369 = vmatpush1.msra.mxu0 0.0
  %370 = vmatprep.subr.mxu0 0.0
  %371 = vmatpush1.msra.mxu0 0.0
  %372 = vmatprep.subr.mxu0 0.0
  %373 = vmatpush1.msra.mxu0 0.0
  %374 = vmatprep.subr.mxu0 0.0
  %375 = vmatpush1.msra.mxu0 0.0
  %376 = vmatprep.subr.mxu0 0.0
  %377 = vmatpush1.msra.mxu0 0.0
  %378 = vmatprep.subr.mxu0 0.0
  %379 = vmatpush1.msra.mxu0 0.0
  %380 = vmatprep.subr.mxu0 0.0
  %381 = vmatpush1.msra.mxu0 0.0
  %382 = vmatprep.subr.mxu0 0.0
  %383 = vmatpush1.msra.mxu0 0.0
  %384 = vmatprep.subr.mxu0 0.0
  %385 = vmatpush1.msra.mxu0 0.0
  %386 = vmatprep.subr.mxu0 0.0
  %387 = vmatpush1.msra.mxu0 0.0
  %388 = vmatprep.mubr.f32.mxu0 0.0
  %389 = vmatmul.mubr.f32.gmra.mrb[0].mxu0 %v322
  %v390 = vpop.f32.mrb[0].mxu0
  %v391 = vadd.f32 %v318, %v390
  %v392 = vpop.f32.mrb[0].mxu0
  %393 = vdwg.mxu0
  %vm394 = vcmp.ge.f32.partialorder %v391, 0.0
  %v395 = vmul.f32 %v391, 0.01
  %v396 = vsel %vm394, %v391, %v395
  %v397 = vld [vmem:[%s6] sm:$0x1]
  %v399 = vlaneseq
  %v400 = vshrl.u32 %v399, 7
  %v401 = vsub.s32 0, %v400
  %v402 = vrot.slane %v397, %v401
  %v404 = vmul.f32 %v396, %v402
  %v405 = vsel %vm320, %v404, 0.0
  %406 = vadd.xlane.f32.xlu0 %v405
  %v407 = vpop.xlane.xlu0 %406
  %v408 = vld [vmem:[#allocation2] sm:$0x1]
  %v410 = vlaneseq
  %v411 = vshrl.u32 %v410, 7
  %v412 = vsub.s32 0, %v411
  %v413 = vrot.slane %v408, %v412
  %v415 = vadd.f32 %v407, %v413
  %v416 = vtanh.pop %v415
  %vm417 = vcmask 7168
  %418 = vst.msk [vmem:[%s8] sm:$0xff] %vm417, %v416
  // Predicated region
  $region34: #{tpu_custom_call.1} parent=0 // pred_check
    _
  $region35: #{tpu_custom_call.1} parent=0 // pred_check_branch
    %420 = sbr.rel (0) target = $region37
  $region36: #{tpu_custom_call.1} parent=0 // pred_region
    _
  $region37: #{tpu_custom_call.1} parent=0 // pred_fallthru
    _
  // Predicated region
  $region38: #{tpu_custom_call.1} parent=0 // pred_check
    _
  $region39: #{tpu_custom_call.1} parent=0 // pred_check_branch
    %422 = sbr.rel (0) target = $region41
  $region40: #{tpu_custom_call.1} parent=0 // pred_region
    _
  $region41: #{tpu_custom_call.1} parent=0 // pred_fallthru
    _

</llo_original>
